<compile_context>
chip_gen: v6e
topology: v6e:2x2x1
jax: 0.10.0
libtpu: 0.0.40
codegen_flags: <defaults>
</compile_context>

<pallas_src>
import functools

import jax
import jax.numpy as jnp
from jax.experimental import pallas as pl
from jax.experimental.pallas import tpu as pltpu

_LANE = 128
_SUBLANE = 8


def _round_up(x, m):
    return (x + m - 1) // m * m


def _make_row_kernel(n_lin, n_id):
    """Kernel for one (tm, tn) tile of: sum_j x_j @ w_j + bias + sum_k identity_k."""

    def kernel(*refs):
        xs = refs[:n_lin]
        ws = refs[n_lin:2 * n_lin]
        b_ref = refs[2 * n_lin]
        id_refs = refs[2 * n_lin + 1: 2 * n_lin + 1 + n_id]
        o_ref = refs[2 * n_lin + 1 + n_id]

        # Bias broadcast to the tile; accumulate in f32.
        acc = jnp.zeros(o_ref.shape, jnp.float32) + b_ref[...]

        # One MXU matmul per contributing Linear block (static unroll).
        # Default precision -> bf16 MXU passes with f32 accumulation.
        for x_ref, w_ref in zip(xs, ws):
            acc = acc + jnp.dot(x_ref[...], w_ref[...],
                                preferred_element_type=jnp.float32)

        # Identity "+" combiner fused into the epilogue (VPU add).
        for id_ref in id_refs:
            acc = acc + id_ref[...].astype(jnp.float32)

        o_ref[...] = acc.astype(o_ref.dtype)

    return kernel


def _row_matmul(xs, ws, bias, ids, n_rows, n_out, n_out_pad, out_dtype,
                tm_max=256, tn_max=256):
    """out[:n_rows, :n_out] = sum_j xs[j] @ ws[j] + bias + sum_k ids[k]."""
    # --- tile sizes: tm multiple of 8, tn lane-dense (multiple of 128) ---
    tm = min(tm_max, _round_up(n_rows, _SUBLANE))
    m_pad = _round_up(n_rows, tm)
    tn = tn_max if n_out_pad % tn_max == 0 else _LANE
    tn = min(tn, n_out_pad)

    # --- pad activations / identity terms so blocks tile exactly ---
    if m_pad != n_rows:
        xs = [jnp.pad(x, ((0, m_pad - n_rows), (0, 0))) for x in xs]
    ids_p = []
    for z in ids:
        pad_m = m_pad - n_rows
        pad_n = n_out_pad - n_out
        if pad_m or pad_n:
            z = jnp.pad(z, ((0, pad_m), (0, pad_n)))
        ids_p.append(z)

    grid = (m_pad // tm, n_out_pad // tn)

    in_specs = (
        # Activations: full K extent (block dim equals array dim -> always legal).
        [pl.BlockSpec((tm, x.shape[1]), lambda i, j: (i, 0)) for x in xs]
        # Weights: full K extent, tiled along N.
        + [pl.BlockSpec((w.shape[0], tn), lambda i, j: (0, j)) for w in ws]
        # Summed bias, tiled along N.
        + [pl.BlockSpec((1, tn), lambda i, j: (0, j))]
        # Identity terms, tiled like the output.
        + [pl.BlockSpec((tm, tn), lambda i, j: (i, j)) for _ in ids_p]
    )
    out_specs = pl.BlockSpec((tm, tn), lambda i, j: (i, j))

    k_total = sum(x.shape[1] for x in xs)
    itemsize = jnp.dtype(out_dtype).itemsize
    flops = 2 * m_pad * k_total * n_out_pad
    bytes_accessed = itemsize * (
        m_pad * k_total                      # activations
        + k_total * n_out_pad                # weights
        + n_out_pad                          # bias
        + len(ids_p) * m_pad * n_out_pad     # identity terms
        + m_pad * n_out_pad                  # output
    )

    out = pl.pallas_call(
        _make_row_kernel(len(xs), len(ids_p)),
        out_shape=jax.ShapeDtypeStruct((m_pad, n_out_pad), out_dtype),
        grid=grid,
        in_specs=in_specs,
        out_specs=out_specs,
        compiler_params=pltpu.CompilerParams(
            dimension_semantics=("parallel", "parallel"),
            vmem_limit_bytes=48 * 1024 * 1024,  # within physical VMEM on v5e/v6e/v7x
        ),
        cost_estimate=pl.CostEstimate(flops=flops, transcendentals=0,
                                      bytes_accessed=bytes_accessed),
    )(*xs, *ws, bias, *ids_p)

    if m_pad != n_rows or n_out_pad != n_out:
        out = out[:n_rows, :n_out]
    return out


class Sequential2DPallas:
    """JAX/Pallas equivalent of Sequential2D.

    blocks[i][j] is one of:
      - None             : contributes nothing (zero vector)
      - "identity"       : torch.nn.Identity()
      - (w, b)           : torch.nn.Linear with w of shape (in_j, out_i)
                           (PyTorch weight already transposed), b (out_i,) or None

    forward(X): out[i] = sum_j blocks[i][j](X[j])  (same semantics as the PyTorch module,
    skipping entries whose block or input is None; sum([]) == 0).
    """

    def __init__(self, blocks):
        assert len(blocks) > 0 and len(blocks[0]) > 0, "blocks must be non-empty"
        ncols = len(blocks[0])
        assert all(len(r) == ncols for r in blocks), "blocks must be 2-D"

        self.rows = []
        for row in blocks:
            lin, ident = [], []
            n_out = None
            for j, f in enumerate(row):
                if f is None:
                    continue
                if isinstance(f, str) and f == "identity":
                    ident.append(j)
                else:
                    w, b = f
                    w = jnp.asarray(w, jnp.float32)
                    if n_out is None:
                        n_out = int(w.shape[1])
                    assert int(w.shape[1]) == n_out, "inconsistent output dims in a row"
                    if b is None:
                        b = jnp.zeros((n_out,), jnp.float32)
                    lin.append((j, w, jnp.asarray(b, jnp.float32)))

            n_out_pad = _round_up(n_out, _LANE) if n_out is not None else None

            # Static per-row padding of weights/bias to a lane-dense output width
            # (done once here, not per forward).
            lin_padded = []
            for j, w, b in lin:
                pad = n_out_pad - n_out
                if pad:
                    w = jnp.pad(w, ((0, 0), (0, pad)))
                    b = jnp.pad(b, ((0, pad),))
                lin_padded.append((j, w, b.reshape(1, n_out_pad)))

            bias_all = None
            if lin_padded:
                bias_all = functools.reduce(lambda a, c: a + c,
                                            [b for _, _, b in lin_padded])

            self.rows.append(dict(lin=lin_padded, bias_all=bias_all,
                                  ident=ident, n_out=n_out, n_out_pad=n_out_pad))

    def __call__(self, X):
        outs = []
        for row in self.rows:
            lin_xs, lin_ws, lin_bs = [], [], []
            for j, w, b in row["lin"]:
                if X[j] is not None:
                    lin_xs.append(jnp.asarray(X[j]))
                    lin_ws.append(w)
                    lin_bs.append(b)
            id_xs = [jnp.asarray(X[j]) for j in row["ident"] if X[j] is not None]

            if not lin_xs and not id_xs:
                outs.append(0)  # matches torch: sum([]) == 0
                continue
            if not lin_xs:
                acc = id_xs[0]
                for z in id_xs[1:]:
                    acc = acc + z
                outs.append(acc)
                continue

            n_rows = lin_xs[0].shape[0]
            if len(lin_bs) == len(row["lin"]):
                bias = row["bias_all"]  # precomputed sum (all blocks present)
            else:
                bias = functools.reduce(lambda a, c: a + c, lin_bs)

            outs.append(
                _row_matmul(lin_xs, lin_ws, bias, id_xs,
                            n_rows, row["n_out"], row["n_out_pad"],
                            lin_xs[0].dtype))
        return outs


if __name__ == "__main__":
    key = jax.random.PRNGKey(0)

    # ---- primary test: lane-dense / tile-aligned shapes ----
    n, d_x, d_h, d_y = 128, 128, 256, 128
    ks = jax.random.split(key, 8)
    x0 = jax.random.normal(ks[0], (n, d_x), jnp.float32)
    x1 = jax.random.normal(ks[1], (n, d_h), jnp.float32)
    x2 = jax.random.normal(ks[2], (n, d_y), jnp.float32)

    w_f1 = jax.random.normal(ks[3], (d_x, d_h), jnp.float32) * 0.1  # Linear(d_x, d_h)
    b_f1 = jax.random.normal(ks[4], (d_h,), jnp.float32) * 0.1
    w_g1 = jax.random.normal(ks[5], (d_h, d_h), jnp.float32) * 0.1  # Linear(d_h, d_h)
    b_g1 = jax.random.normal(ks[6], (d_h,), jnp.float32) * 0.1
    w_f2 = jax.random.normal(ks[7], (d_h, d_y), jnp.float32) * 0.1  # Linear(d_h, d_y)
    b_f2 = jnp.zeros((d_y,), jnp.float32)

    # blocks = [[I,    None, None],
    #           [f1,   g1,   None],   ("+"-combined Linears, one fused kernel)
    #           [None, f2,   I   ]]   (Linear + identity fused in the kernel epilogue)
    blocks = [
        ["identity",    None,          None       ],
        [(w_f1, b_f1),  (w_g1, b_g1),  None       ],
        [None,          (w_f2, b_f2),  "identity" ],
    ]
    model = Sequential2DPallas(blocks)
    Y = model([x0, x1, x2])
    Y = [jax.block_until_ready(y) for y in Y]

    ref = [
        x0,
        jnp.dot(x0, w_f1) + b_f1 + jnp.dot(x1, w_g1) + b_g1,
        jnp.dot(x1, w_f2) + b_f2 + x2,
    ]
    for i, (y, r) in enumerate(zip(Y, ref)):
        assert y.shape == r.shape, (i, y.shape, r.shape)
        assert jnp.allclose(y, r, atol=2e-2, rtol=2e-2), f"row {i} mismatch"

    # ---- secondary test: unaligned shapes exercise the M/N padding path ----
    n2, da, db, dc = 40, 48, 96, 24
    k2 = jax.random.split(jax.random.PRNGKey(1), 6)
    u0 = jax.random.normal(k2[0], (n2, da), jnp.float32)
    u1 = jax.random.normal(k2[1], (n2, db), jnp.float32)
    u2 = jax.random.normal(k2[2], (n2, dc), jnp.float32)
    wa = jax.random.normal(k2[3], (da, db), jnp.float32) * 0.1
    ba = jax.random.normal(k2[4], (db,), jnp.float32) * 0.1
    wb = jax.random.normal(k2[5], (db, dc), jnp.float32) * 0.1

    blocks2 = [
        ["identity",  None,        None],
        [(wa, ba),    "identity",  None],
        [None,        (wb, None),  None],
    ]
    model2 = Sequential2DPallas(blocks2)
    Y2 = model2([u0, u1, u2])
    Y2 = [jax.block_until_ready(y) for y in Y2]
    ref2 = [
        u0,
        jnp.dot(u0, wa) + ba + u1,
        jnp.dot(u1, wb),
    ]
    for i, (y, r) in enumerate(zip(Y2, ref2)):
        assert y.shape == r.shape, (i, y.shape, r.shape)
        assert jnp.allclose(y, r, atol=2e-2, rtol=2e-2), f"row {i} mismatch (padded case)"

    print("KERNEL_OK")
</pallas_src>

<mosaic_0001>
module attributes {stable_mosaic.version = 11 : i64} {
  func.func @kernel(%arg0: i32, %arg1: i32, %arg2: memref<128x128xf32, #tpu.memory_space<vmem>>, %arg3: memref<128x256xf32, #tpu.memory_space<vmem>>, %arg4: memref<128x256xf32, #tpu.memory_space<vmem>>, %arg5: memref<256x256xf32, #tpu.memory_space<vmem>>, %arg6: memref<1x256xf32, #tpu.memory_space<vmem>>, %arg7: memref<128x256xf32, #tpu.memory_space<vmem>>) attributes {dimension_semantics = [#tpu.dimension_semantics<parallel>, #tpu.dimension_semantics<parallel>], iteration_bounds = array<i64: 1, 1>, scalar_prefetch = 0 : i64, scratch_operands = 0 : i64, tpu.core_type = #tpu.core_type<tc>, window_params = [{transform_indices = @transform_0, window_bounds = array<i64: 128, 128>}, {transform_indices = @transform_1, window_bounds = array<i64: 128, 256>}, {transform_indices = @transform_2, window_bounds = array<i64: 128, 256>}, {transform_indices = @transform_3, window_bounds = array<i64: 256, 256>}, {transform_indices = @transform_4, window_bounds = array<i64: 1, 256>}, {transform_indices = @transform_5, window_bounds = array<i64: 128, 256>}]} {
    %cst = arith.constant 0.000000e+00 : f32
    %0 = vector.broadcast %cst : f32 to vector<128x256xf32>
    %c0 = arith.constant 0 : index
    %c0_0 = arith.constant 0 : index
    %1 = vector.load %arg6[%c0, %c0_0] : memref<1x256xf32, #tpu.memory_space<vmem>>, vector<1x256xf32>
    %2 = vector.broadcast %1 : vector<1x256xf32> to vector<128x256xf32>
    %3 = arith.addf %0, %2 : vector<128x256xf32>
    %c0_1 = arith.constant 0 : index
    %c0_2 = arith.constant 0 : index
    %4 = vector.load %arg2[%c0_1, %c0_2] : memref<128x128xf32, #tpu.memory_space<vmem>>, vector<128x128xf32>
    %c0_3 = arith.constant 0 : index
    %c0_4 = arith.constant 0 : index
    %5 = vector.load %arg4[%c0_3, %c0_4] : memref<128x256xf32, #tpu.memory_space<vmem>>, vector<128x256xf32>
    %cst_5 = arith.constant dense<0.000000e+00> : vector<128x256xf32>
    %6 = tpu.matmul %4, %5, %cst_5 {dimension_numbers = #tpu.dot_dimension_numbers<[1], [0], [0], [1], [0, 0, 1, 1], [], []>} : vector<128x128xf32>, vector<128x256xf32>, vector<128x256xf32> -> vector<128x256xf32>
    %7 = arith.addf %3, %6 : vector<128x256xf32>
    %c0_6 = arith.constant 0 : index
    %c0_7 = arith.constant 0 : index
    %8 = vector.load %arg3[%c0_6, %c0_7] : memref<128x256xf32, #tpu.memory_space<vmem>>, vector<128x256xf32>
    %c0_8 = arith.constant 0 : index
    %c0_9 = arith.constant 0 : index
    %9 = vector.load %arg5[%c0_8, %c0_9] : memref<256x256xf32, #tpu.memory_space<vmem>>, vector<256x256xf32>
    %cst_10 = arith.constant dense<0.000000e+00> : vector<128x256xf32>
    %10 = tpu.matmul %8, %9, %cst_10 {dimension_numbers = #tpu.dot_dimension_numbers<[1], [0], [0], [1], [0, 0, 1, 1], [], []>} : vector<128x256xf32>, vector<256x256xf32>, vector<128x256xf32> -> vector<128x256xf32>
    %11 = arith.addf %7, %10 : vector<128x256xf32>
    %c0_11 = arith.constant 0 : index
    %c0_12 = arith.constant 0 : index
    %12 = vector.load %arg7[%c0_11, %c0_12] : memref<128x256xf32, #tpu.memory_space<vmem>>, vector<128x256xf32>
    tpu.vector_store %arg7[%c0_11, %c0_12], %11 {strides = array<i32>} : memref<128x256xf32, #tpu.memory_space<vmem>>, vector<128x256xf32>,
    return
  }
  func.func @transform_0(%arg0: i32, %arg1: i32) -> (i32, i32) {
    %c0_i32 = arith.constant 0 : i32
    %c0_i32_0 = arith.constant 0 : i32
    return %arg0, %c0_i32 : i32, i32
  }
  func.func @transform_1(%arg0: i32, %arg1: i32) -> (i32, i32) {
    %c0_i32 = arith.constant 0 : i32
    %c0_i32_0 = arith.constant 0 : i32
    return %arg0, %c0_i32 : i32, i32
  }
  func.func @transform_2(%arg0: i32, %arg1: i32) -> (i32, i32) {
    %c0_i32 = arith.constant 0 : i32
    %c0_i32_0 = arith.constant 0 : i32
    return %c0_i32, %arg1 : i32, i32
  }
  func.func @transform_3(%arg0: i32, %arg1: i32) -> (i32, i32) {
    %c0_i32 = arith.constant 0 : i32
    %c0_i32_0 = arith.constant 0 : i32
    return %c0_i32, %arg1 : i32, i32
  }
  func.func @transform_4(%arg0: i32, %arg1: i32) -> (i32, i32) {
    %c0_i32 = arith.constant 0 : i32
    %c0_i32_0 = arith.constant 0 : i32
    return %c0_i32, %arg1 : i32, i32
  }
  func.func @transform_5(%arg0: i32, %arg1: i32) -> (i32, i32) {
    %c0_i32 = arith.constant 0 : i32
    return %arg0, %arg1 : i32, i32
  }
}

</mosaic_0001>

<llo_original>
// kernel: tpu_custom_call.1
$region0: #{tpu_custom_call.1}
  #allocation0 [shape = 'u32[]', space=smem, size = 0x4, offset = 0x4, fixed_abs, tag = 'smem constant byte address 0x4 - core index']
  #allocation1 [shape = 'u32[144,128]{1,0:T(1,128)}', space=vmem, size = 0x12000, scoped, tag = 'internal scratch']
  %s0 = inlined_call_operand.hbm [shape: f32[128,128], index: 0, kind: input, shape index: {}]
  %s1 = inlined_call_operand.hbm [shape: f32[128,256], index: 1, kind: input, shape index: {}]
  %s2 = inlined_call_operand.hbm [shape: f32[128,256], index: 2, kind: input, shape index: {}]
  %s3 = inlined_call_operand.hbm [shape: f32[256,256], index: 3, kind: input, shape index: {}]
  %s4 = inlined_call_operand.vmem [shape: f32[1,256], index: 4, kind: input, shape index: {}]
  %s5 = inlined_call_operand.hbm [shape: f32[128,256], index: 5, kind: output, shape index: {}]
  %s6 = sld [smem:[#allocation0]]
  $region46: #{tpu_custom_call.1} parent=0
    _
  %s8 = ssub.s32 1, %s6
  %s9 = scalar_select 0, %s8, %s6
  $region1: #{tpu_custom_call.1} parent=0
    #allocation2 [shape = 'u8[65536]{0}', space=vmem, size = 0x10000, scoped, tag = 'input window, operand 0, single buffered']
    #allocation3 [shape = 's32[1]{0}', space=sflag, size = 0x4, scoped, tag = 'scoped memory for tpu_custom_call.1']
    #allocation4 [shape = 's32[1]{0}', space=sflag, size = 0x4, scoped, tag = 'scoped memory for tpu_custom_call.1']
    #allocation5 [shape = 'u8[131072]{0}', space=vmem, size = 0x20000, scoped, tag = 'input window, operand 1, single buffered']
    #allocation6 [shape = 's32[1]{0}', space=sflag, size = 0x4, scoped, tag = 'scoped memory for tpu_custom_call.1']
    #allocation7 [shape = 'u8[131072]{0}', space=vmem, size = 0x20000, scoped, tag = 'input window, operand 2, single buffered']
    #allocation8 [shape = 'u8[262144]{0}', space=vmem, size = 0x40000, scoped, tag = 'input window, operand 3, single buffered']
    #allocation9 [shape = 's32[1]{0}', space=sflag, size = 0x4, scoped, tag = 'scoped memory for tpu_custom_call.1']
    #allocation10 [shape = 'u8[131072]{0}', space=vmem, size = 0x20000, scoped, tag = 'output window, operand 0, single buffered']
    %10 = vsyncpa [#allocation3], 0
    %11 = vsyncpa [#allocation6], 0
    %12 = vsyncpa [#allocation9], 0
    %13 = vsyncpa [#allocation4], 0
    // Predicated region
    $region2: #{tpu_custom_call.1} parent=1 // pred_check
      _
    $region3: #{tpu_custom_call.1} parent=1 // pred_check_branch
      %15 = sbr.rel (0) target = $region5
    $region4: #{tpu_custom_call.1} parent=1 // pred_region
      %s17 = ssub.s32 2048, 2048
      %18 = vsyncadd [#allocation3], %s17
      %s19 = sshll.u32 [#allocation2], 4
      %s20 = int_to_ptr.vmem [resolvable:$true] %s19
      %25 = dma.hbm_to_vmem [thread:$0]  %s0, 2048, %s20, [#allocation3], 128, 128, 8
    $region5: #{tpu_custom_call.1} parent=1 // pred_fallthru
      _
    // Predicated region
    $region6: #{tpu_custom_call.1} parent=1 // pred_check
      _
    $region7: #{tpu_custom_call.1} parent=1 // pred_check_branch
      %27 = sbr.rel (0) target = $region9
    $region8: #{tpu_custom_call.1} parent=1 // pred_region
      %s29 = ssub.s32 4096, 4096
      %30 = vsyncadd [#allocation6], %s29
      %s31 = sshll.u32 [#allocation5], 4
      %s32 = int_to_ptr.vmem [resolvable:$true] %s31
      %37 = dma.hbm_to_vmem [thread:$0]  %s1, 4096, %s32, [#allocation6], 256, 256, 16
    $region9: #{tpu_custom_call.1} parent=1 // pred_fallthru
      _
    // Predicated region
    $region10: #{tpu_custom_call.1} parent=1 // pred_check
      _
    $region11: #{tpu_custom_call.1} parent=1 // pred_check_branch
      %39 = sbr.rel (0) target = $region13
    $region12: #{tpu_custom_call.1} parent=1 // pred_region
      %s41 = ssub.s32 4096, 4096
      %42 = vsyncadd [#allocation6], %s41
      %s43 = sshll.u32 [#allocation7], 4
      %s44 = int_to_ptr.vmem [resolvable:$true] %s43
      %49 = dma.hbm_to_vmem [thread:$0]  %s2, 4096, %s44, [#allocation6], 256, 256, 16
    $region13: #{tpu_custom_call.1} parent=1 // pred_fallthru
      _
    // Predicated region
    $region14: #{tpu_custom_call.1} parent=1 // pred_check
      _
    $region15: #{tpu_custom_call.1} parent=1 // pred_check_branch
      %51 = sbr.rel (0) target = $region17
    $region16: #{tpu_custom_call.1} parent=1 // pred_region
      %s53 = ssub.s32 8192, 8192
      %54 = vsyncadd [#allocation9], %s53
      %s55 = sshll.u32 [#allocation8], 4
      %s56 = int_to_ptr.vmem [resolvable:$true] %s55
      %61 = dma.hbm_to_vmem [thread:$0]  %s3, 8192, %s56, [#allocation9], 256, 256, 16
    $region17: #{tpu_custom_call.1} parent=1 // pred_fallthru
      _
    // Predicated region
    $region18: #{tpu_custom_call.1} parent=1 // pred_check
      _
    $region19: #{tpu_custom_call.1} parent=1 // pred_check_branch
      %63 = sbr.rel (0) target = $region21
    $region20: #{tpu_custom_call.1} parent=1 // pred_region
      _
    $region21: #{tpu_custom_call.1} parent=1 // pred_fallthru
      _
    // Predicated region
    $region22: #{tpu_custom_call.1} parent=1 // pred_check
      _
    $region23: #{tpu_custom_call.1} parent=1 // pred_check_branch
      %65 = sbr.rel (0) target = $region25
    $region24: #{tpu_custom_call.1} parent=1 // pred_region
      %66 = dma.done [#allocation3], 2048
    $region25: #{tpu_custom_call.1} parent=1 // pred_fallthru
      _
    // Predicated region
    $region26: #{tpu_custom_call.1} parent=1 // pred_check
      _
    $region27: #{tpu_custom_call.1} parent=1 // pred_check_branch
      %68 = sbr.rel (0) target = $region29
    $region28: #{tpu_custom_call.1} parent=1 // pred_region
      %69 = dma.done [#allocation6], 4096
    $region29: #{tpu_custom_call.1} parent=1 // pred_fallthru
      _
    // Predicated region
    $region30: #{tpu_custom_call.1} parent=1 // pred_check
      _
    $region31: #{tpu_custom_call.1} parent=1 // pred_check_branch
      %71 = sbr.rel (0) target = $region33
    $region32: #{tpu_custom_call.1} parent=1 // pred_region
      %72 = dma.done [#allocation6], 4096
    $region33: #{tpu_custom_call.1} parent=1 // pred_fallthru
      _
    // Predicated region
    $region34: #{tpu_custom_call.1} parent=1 // pred_check
      _
    $region35: #{tpu_custom_call.1} parent=1 // pred_check_branch
      %74 = sbr.rel (0) target = $region37
    $region36: #{tpu_custom_call.1} parent=1 // pred_region
      %75 = dma.done [#allocation9], 8192
    $region37: #{tpu_custom_call.1} parent=1 // pred_fallthru
      _
    %v76 = vld [vmem:[%s4] sm:$0x3]
    %v78 = vlaneseq
    %v79 = vshrl.u32 %v78, 7
    %v80 = vsub.s32 0, %v79
    %v81 = vrot.slane %v76, %v80
    %v82 = vlaneseq
    %v83 = vshrl.u32 %v82, 7
    %v84 = vsub.s32 1, %v83
    %v85 = vrot.slane %v76, %v84
    %v88 = vadd.f32 %v81, 0.0
    %v89 = vadd.f32 %v85, 0.0
    %v90 = vld [vmem:[#allocation2] sm:$0xff]
    %v91 = vld [vmem:[#allocation2 + $0x8] sm:$0xff]
    %v92 = vld [vmem:[#allocation2 + $0x10] sm:$0xff]
    %v93 = vld [vmem:[#allocation2 + $0x18] sm:$0xff]
    %v94 = vld [vmem:[#allocation2 + $0x20] sm:$0xff]
    %v95 = vld [vmem:[#allocation2 + $0x28] sm:$0xff]
    %v96 = vld [vmem:[#allocation2 + $0x30] sm:$0xff]
    %v97 = vld [vmem:[#allocation2 + $0x38] sm:$0xff]
    %v98 = vld [vmem:[#allocation2 + $0x40] sm:$0xff]
    %v99 = vld [vmem:[#allocation2 + $0x48] sm:$0xff]
    %v100 = vld [vmem:[#allocation2 + $0x50] sm:$0xff]
    %v101 = vld [vmem:[#allocation2 + $0x58] sm:$0xff]
    %v102 = vld [vmem:[#allocation2 + $0x60] sm:$0xff]
    %v103 = vld [vmem:[#allocation2 + $0x68] sm:$0xff]
    %v104 = vld [vmem:[#allocation2 + $0x70] sm:$0xff]
    %v105 = vld [vmem:[#allocation2 + $0x78] sm:$0xff]
    %v106 = vld [vmem:[#allocation7] sm:$0xff]
    %v107 = vld [vmem:[#allocation7 + $0x8] sm:$0xff]
    %v108 = vld [vmem:[#allocation7 + $0x10] sm:$0xff]
    %v109 = vld [vmem:[#allocation7 + $0x18] sm:$0xff]
    %v110 = vld [vmem:[#allocation7 + $0x20] sm:$0xff]
    %v111 = vld [vmem:[#allocation7 + $0x28] sm:$0xff]
    %v112 = vld [vmem:[#allocation7 + $0x30] sm:$0xff]
    %v113 = vld [vmem:[#allocation7 + $0x38] sm:$0xff]
    %v114 = vld [vmem:[#allocation7 + $0x40] sm:$0xff]
    %v115 = vld [vmem:[#allocation7 + $0x48] sm:$0xff]
    %v116 = vld [vmem:[#allocation7 + $0x50] sm:$0xff]
    %v117 = vld [vmem:[#allocation7 + $0x58] sm:$0xff]
    %v118 = vld [vmem:[#allocation7 + $0x60] sm:$0xff]
    %v119 = vld [vmem:[#allocation7 + $0x68] sm:$0xff]
    %v120 = vld [vmem:[#allocation7 + $0x70] sm:$0xff]
    %v121 = vld [vmem:[#allocation7 + $0x78] sm:$0xff]
    %v122 = vld [vmem:[#allocation7 + $0x80] sm:$0xff]
    %v123 = vld [vmem:[#allocation7 + $0x88] sm:$0xff]
    %v124 = vld [vmem:[#allocation7 + $0x90] sm:$0xff]
    %v125 = vld [vmem:[#allocation7 + $0x98] sm:$0xff]
    %v126 = vld [vmem:[#allocation7 + $0xa0] sm:$0xff]
    %v127 = vld [vmem:[#allocation7 + $0xa8] sm:$0xff]
    %v128 = vld [vmem:[#allocation7 + $0xb0] sm:$0xff]
    %v129 = vld [vmem:[#allocation7 + $0xb8] sm:$0xff]
    %v130 = vld [vmem:[#allocation7 + $0xc0] sm:$0xff]
    %v131 = vld [vmem:[#allocation7 + $0xc8] sm:$0xff]
    %v132 = vld [vmem:[#allocation7 + $0xd0] sm:$0xff]
    %v133 = vld [vmem:[#allocation7 + $0xd8] sm:$0xff]
    %v134 = vld [vmem:[#allocation7 + $0xe0] sm:$0xff]
    %v135 = vld [vmem:[#allocation7 + $0xe8] sm:$0xff]
    %v136 = vld [vmem:[#allocation7 + $0xf0] sm:$0xff]
    %v137 = vld [vmem:[#allocation7 + $0xf8] sm:$0xff]
    %138 = vmatprep.subr.mxu0 %v137
    %139 = vmatpush1.msra.mxu0 %v136
    %140 = vmatprep.subr.mxu0 %v135
    %141 = vmatpush1.msra.mxu0 %v134
    %142 = vmatprep.subr.mxu0 %v133
    %143 = vmatpush1.msra.mxu0 %v132
    %144 = vmatprep.subr.mxu0 %v131
    %145 = vmatpush1.msra.mxu0 %v130
    %146 = vmatprep.subr.mxu0 %v129
    %147 = vmatpush1.msra.mxu0 %v128
    %148 = vmatprep.subr.mxu0 %v127
    %149 = vmatpush1.msra.mxu0 %v126
    %150 = vmatprep.subr.mxu0 %v125
    %151 = vmatpush1.msra.mxu0 %v124
    %152 = vmatprep.subr.mxu0 %v123
    %153 = vmatpush1.msra.mxu0 %v122
    %154 = vmatprep.subr.mxu0 %v121
    %155 = vmatpush1.msra.mxu0 %v120
    %156 = vmatprep.subr.mxu0 %v119
    %157 = vmatpush1.msra.mxu0 %v118
    %158 = vmatprep.subr.mxu0 %v117
    %159 = vmatpush1.msra.mxu0 %v116
    %160 = vmatprep.subr.mxu0 %v115
    %161 = vmatpush1.msra.mxu0 %v114
    %162 = vmatprep.subr.mxu0 %v113
    %163 = vmatpush1.msra.mxu0 %v112
    %164 = vmatprep.subr.mxu0 %v111
    %165 = vmatpush1.msra.mxu0 %v110
    %166 = vmatprep.subr.mxu0 %v109
    %167 = vmatpush1.msra.mxu0 %v108
    %168 = vmatprep.subr.mxu0 %v107
    %169 = vmatpush1.msra.mxu0 %v106
    %170 = vmatprep.subr.mxu0 0.0
    %171 = vmatpush2.msra.mxu0 0.0
    %172 = vmatprep.subr.mxu0 0.0
    %173 = vmatpush2.msra.mxu0 0.0
    %174 = vmatprep.subr.mxu0 0.0
    %175 = vmatpush2.msra.mxu0 0.0
    %176 = vmatprep.subr.mxu0 0.0
    %177 = vmatpush2.msra.mxu0 0.0
    %178 = vmatprep.subr.mxu0 0.0
    %179 = vmatpush2.msra.mxu0 0.0
    %180 = vmatprep.subr.mxu0 0.0
    %181 = vmatpush2.msra.mxu0 0.0
    %182 = vmatprep.subr.mxu0 0.0
    %183 = vmatpush2.msra.mxu0 0.0
    %184 = vmatprep.subr.mxu0 0.0
    %185 = vmatpush2.msra.mxu0 0.0
    %186 = vmatprep.subr.mxu0 0.0
    %187 = vmatpush2.msra.mxu0 0.0
    %188 = vmatprep.subr.mxu0 0.0
    %189 = vmatpush2.msra.mxu0 0.0
    %190 = vmatprep.subr.mxu0 0.0
    %191 = vmatpush2.msra.mxu0 0.0
    %192 = vmatprep.subr.mxu0 0.0
    %193 = vmatpush2.msra.mxu0 0.0
    %194 = vmatprep.subr.mxu0 0.0
    %195 = vmatpush2.msra.mxu0 0.0
    %196 = vmatprep.subr.mxu0 0.0
    %197 = vmatpush2.msra.mxu0 0.0
    %198 = vmatprep.subr.mxu0 0.0
    %199 = vmatpush2.msra.mxu0 0.0
    %200 = vmatprep.subr.mxu0 0.0
    %201 = vmatpush2.msra.mxu0 0.0
    %202 = vmatprep.mubr.f32.mxu0 0.0
    %203 = vmatmul.mubr.f32.gmra.mxu0 %v90
    %v204 = vpop.f32.mrf.mxu0
    %v205 = vadd.f32 0.0, %v204
    %v206 = vpop.f32.mrf.mxu0
    %v207 = vadd.f32 0.0, %v206
    %208 = vmatprep.mubr.f32.mxu0 0.0
    %209 = vmatmul.mubr.f32.gmra.mxu0 %v91
    %v210 = vpop.f32.mrf.mxu0
    %v211 = vadd.f32 0.0, %v210
    %v212 = vpop.f32.mrf.mxu0
    %v213 = vadd.f32 0.0, %v212
    %214 = vmatprep.mubr.f32.mxu0 0.0
    %215 = vmatmul.mubr.f32.gmra.mxu0 %v92
    %v216 = vpop.f32.mrf.mxu0
    %v217 = vadd.f32 0.0, %v216
    %v218 = vpop.f32.mrf.mxu0
    %v219 = vadd.f32 0.0, %v218
    %220 = vmatprep.mubr.f32.mxu0 0.0
    %221 = vmatmul.mubr.f32.gmra.mxu0 %v93
    %v222 = vpop.f32.mrf.mxu0
    %v223 = vadd.f32 0.0, %v222
    %v224 = vpop.f32.mrf.mxu0
    %v225 = vadd.f32 0.0, %v224
    %226 = vmatprep.mubr.f32.mxu0 0.0
    %227 = vmatmul.mubr.f32.gmra.mxu0 %v94
    %v228 = vpop.f32.mrf.mxu0
    %v229 = vadd.f32 0.0, %v228
    %v230 = vpop.f32.mrf.mxu0
    %v231 = vadd.f32 0.0, %v230
    %232 = vmatprep.mubr.f32.mxu0 0.0
    %233 = vmatmul.mubr.f32.gmra.mxu0 %v95
    %v234 = vpop.f32.mrf.mxu0
    %v235 = vadd.f32 0.0, %v234
    %v236 = vpop.f32.mrf.mxu0
    %v237 = vadd.f32 0.0, %v236
    %238 = vmatprep.mubr.f32.mxu0 0.0
    %239 = vmatmul.mubr.f32.gmra.mxu0 %v96
    %v240 = vpop.f32.mrf.mxu0
    %v241 = vadd.f32 0.0, %v240
    %v242 = vpop.f32.mrf.mxu0
    %v243 = vadd.f32 0.0, %v242
    %244 = vmatprep.mubr.f32.mxu0 0.0
    %245 = vmatmul.mubr.f32.gmra.mxu0 %v97
    %v246 = vpop.f32.mrf.mxu0
    %v247 = vadd.f32 0.0, %v246
    %v248 = vpop.f32.mrf.mxu0
    %v249 = vadd.f32 0.0, %v248
    %250 = vmatprep.mubr.f32.mxu0 0.0
    %251 = vmatmul.mubr.f32.gmra.mxu0 %v98
    %v252 = vpop.f32.mrf.mxu0
    %v253 = vadd.f32 0.0, %v252
    %v254 = vpop.f32.mrf.mxu0
    %v255 = vadd.f32 0.0, %v254
    %256 = vmatprep.mubr.f32.mxu0 0.0
    %257 = vmatmul.mubr.f32.gmra.mxu0 %v99
    %v258 = vpop.f32.mrf.mxu0
    %v259 = vadd.f32 0.0, %v258
    %v260 = vpop.f32.mrf.mxu0
    %v261 = vadd.f32 0.0, %v260
    %262 = vmatprep.mubr.f32.mxu0 0.0
    %263 = vmatmul.mubr.f32.gmra.mxu0 %v100
    %v264 = vpop.f32.mrf.mxu0
    %v265 = vadd.f32 0.0, %v264
    %v266 = vpop.f32.mrf.mxu0
    %v267 = vadd.f32 0.0, %v266
    %268 = vmatprep.mubr.f32.mxu0 0.0
    %269 = vmatmul.mubr.f32.gmra.mxu0 %v101
    %v270 = vpop.f32.mrf.mxu0
    %v271 = vadd.f32 0.0, %v270
    %v272 = vpop.f32.mrf.mxu0
    %v273 = vadd.f32 0.0, %v272
    %274 = vmatprep.mubr.f32.mxu0 0.0
    %275 = vmatmul.mubr.f32.gmra.mxu0 %v102
    %v276 = vpop.f32.mrf.mxu0
    %v277 = vadd.f32 0.0, %v276
    %v278 = vpop.f32.mrf.mxu0
    %v279 = vadd.f32 0.0, %v278
    %280 = vmatprep.mubr.f32.mxu0 0.0
    %281 = vmatmul.mubr.f32.gmra.mxu0 %v103
    %v282 = vpop.f32.mrf.mxu0
    %v283 = vadd.f32 0.0, %v282
    %v284 = vpop.f32.mrf.mxu0
    %v285 = vadd.f32 0.0, %v284
    %286 = vmatprep.mubr.f32.mxu0 0.0
    %287 = vmatmul.mubr.f32.gmra.mxu0 %v104
    %v288 = vpop.f32.mrf.mxu0
    %v289 = vadd.f32 0.0, %v288
    %v290 = vpop.f32.mrf.mxu0
    %v291 = vadd.f32 0.0, %v290
    %292 = vmatprep.mubr.f32.mxu0 0.0
    %293 = vmatmul.mubr.f32.gmra.mxu0 %v105
    %v294 = vpop.f32.mrf.mxu0
    %v295 = vadd.f32 0.0, %v294
    %v296 = vpop.f32.mrf.mxu0
    %v297 = vadd.f32 0.0, %v296
    %298 = vdwg.mxu0
    %v299 = vadd.f32 %v88, %v205
    %v300 = vadd.f32 %v89, %v207
    %v301 = vadd.f32 %v88, %v211
    %v302 = vadd.f32 %v89, %v213
    %v303 = vadd.f32 %v88, %v217
    %v304 = vadd.f32 %v89, %v219
    %v305 = vadd.f32 %v88, %v223
    %v306 = vadd.f32 %v89, %v225
    %v307 = vadd.f32 %v88, %v229
    %v308 = vadd.f32 %v89, %v231
    %v309 = vadd.f32 %v88, %v235
    %v310 = vadd.f32 %v89, %v237
    %v311 = vadd.f32 %v88, %v241
    %v312 = vadd.f32 %v89, %v243
    %v313 = vadd.f32 %v88, %v247
    %v314 = vadd.f32 %v89, %v249
    %v315 = vadd.f32 %v88, %v253
    %v316 = vadd.f32 %v89, %v255
    %v317 = vadd.f32 %v88, %v259
    %v318 = vadd.f32 %v89, %v261
    %v319 = vadd.f32 %v88, %v265
    %v320 = vadd.f32 %v89, %v267
    %v321 = vadd.f32 %v88, %v271
    %v322 = vadd.f32 %v89, %v273
    %v323 = vadd.f32 %v88, %v277
    %v324 = vadd.f32 %v89, %v279
    %v325 = vadd.f32 %v88, %v283
    %v326 = vadd.f32 %v89, %v285
    %v327 = vadd.f32 %v88, %v289
    %v328 = vadd.f32 %v89, %v291
    %v329 = vadd.f32 %v88, %v295
    %v330 = vadd.f32 %v89, %v297
    %v331 = vld [vmem:[#allocation5] sm:$0xff]
    %v332 = vld [vmem:[#allocation5 + $0x8] sm:$0xff]
    %v333 = vld [vmem:[#allocation5 + $0x10] sm:$0xff]
    %v334 = vld [vmem:[#allocation5 + $0x18] sm:$0xff]
    %v335 = vld [vmem:[#allocation5 + $0x20] sm:$0xff]
    %v336 = vld [vmem:[#allocation5 + $0x28] sm:$0xff]
    %v337 = vld [vmem:[#allocation5 + $0x30] sm:$0xff]
    %v338 = vld [vmem:[#allocation5 + $0x38] sm:$0xff]
    %v339 = vld [vmem:[#allocation5 + $0x40] sm:$0xff]
    %v340 = vld [vmem:[#allocation5 + $0x48] sm:$0xff]
    %v341 = vld [vmem:[#allocation5 + $0x50] sm:$0xff]
    %v342 = vld [vmem:[#allocation5 + $0x58] sm:$0xff]
    %v343 = vld [vmem:[#allocation5 + $0x60] sm:$0xff]
    %v344 = vld [vmem:[#allocation5 + $0x68] sm:$0xff]
    %v345 = vld [vmem:[#allocation5 + $0x70] sm:$0xff]
    %v346 = vld [vmem:[#allocation5 + $0x78] sm:$0xff]
    %v347 = vld [vmem:[#allocation5 + $0x80] sm:$0xff]
    %v348 = vld [vmem:[#allocation5 + $0x88] sm:$0xff]
    %v349 = vld [vmem:[#allocation5 + $0x90] sm:$0xff]
    %v350 = vld [vmem:[#allocation5 + $0x98] sm:$0xff]
    %v351 = vld [vmem:[#allocation5 + $0xa0] sm:$0xff]
    %v352 = vld [vmem:[#allocation5 + $0xa8] sm:$0xff]
    %v353 = vld [vmem:[#allocation5 + $0xb0] sm:$0xff]
    %v354 = vld [vmem:[#allocation5 + $0xb8] sm:$0xff]
    %v355 = vld [vmem:[#allocation5 + $0xc0] sm:$0xff]
    %v356 = vld [vmem:[#allocation5 + $0xc8] sm:$0xff]
    %v357 = vld [vmem:[#allocation5 + $0xd0] sm:$0xff]
    %v358 = vld [vmem:[#allocation5 + $0xd8] sm:$0xff]
    %v359 = vld [vmem:[#allocation5 + $0xe0] sm:$0xff]
    %v360 = vld [vmem:[#allocation5 + $0xe8] sm:$0xff]
    %v361 = vld [vmem:[#allocation5 + $0xf0] sm:$0xff]
    %v362 = vld [vmem:[#allocation5 + $0xf8] sm:$0xff]
    %v363 = vld [vmem:[#allocation8] sm:$0xff]
    %v364 = vld [vmem:[#allocation8 + $0x8] sm:$0xff]
    %v365 = vld [vmem:[#allocation8 + $0x10] sm:$0xff]
    %v366 = vld [vmem:[#allocation8 + $0x18] sm:$0xff]
    %v367 = vld [vmem:[#allocation8 + $0x20] sm:$0xff]
    %v368 = vld [vmem:[#allocation8 + $0x28] sm:$0xff]
    %v369 = vld [vmem:[#allocation8 + $0x30] sm:$0xff]
    %v370 = vld [vmem:[#allocation8 + $0x38] sm:$0xff]
    %v371 = vld [vmem:[#allocation8 + $0x40] sm:$0xff]
    %v372 = vld [vmem:[#allocation8 + $0x48] sm:$0xff]
    %v373 = vld [vmem:[#allocation8 + $0x50] sm:$0xff]
    %v374 = vld [vmem:[#allocation8 + $0x58] sm:$0xff]
    %v375 = vld [vmem:[#allocation8 + $0x60] sm:$0xff]
    %v376 = vld [vmem:[#allocation8 + $0x68] sm:$0xff]
    %v377 = vld [vmem:[#allocation8 + $0x70] sm:$0xff]
    %v378 = vld [vmem:[#allocation8 + $0x78] sm:$0xff]
    %v379 = vld [vmem:[#allocation8 + $0x80] sm:$0xff]
    %v380 = vld [vmem:[#allocation8 + $0x88] sm:$0xff]
    %v381 = vld [vmem:[#allocation8 + $0x90] sm:$0xff]
    %v382 = vld [vmem:[#allocation8 + $0x98] sm:$0xff]
    %v383 = vld [vmem:[#allocation8 + $0xa0] sm:$0xff]
    %v384 = vld [vmem:[#allocation8 + $0xa8] sm:$0xff]
    %v385 = vld [vmem:[#allocation8 + $0xb0] sm:$0xff]
    %v386 = vld [vmem:[#allocation8 + $0xb8] sm:$0xff]
    %v387 = vld [vmem:[#allocation8 + $0xc0] sm:$0xff]
    %v388 = vld [vmem:[#allocation8 + $0xc8] sm:$0xff]
    %v389 = vld [vmem:[#allocation8 + $0xd0] sm:$0xff]
    %v390 = vld [vmem:[#allocation8 + $0xd8] sm:$0xff]
    %v391 = vld [vmem:[#allocation8 + $0xe0] sm:$0xff]
    %v392 = vld [vmem:[#allocation8 + $0xe8] sm:$0xff]
    %v393 = vld [vmem:[#allocation8 + $0xf0] sm:$0xff]
    %v394 = vld [vmem:[#allocation8 + $0xf8] sm:$0xff]
    %v395 = vld [vmem:[#allocation8 + $0x100] sm:$0xff]
    %v396 = vld [vmem:[#allocation8 + $0x108] sm:$0xff]
    %v397 = vld [vmem:[#allocation8 + $0x110] sm:$0xff]
    %v398 = vld [vmem:[#allocation8 + $0x118] sm:$0xff]
    %v399 = vld [vmem:[#allocation8 + $0x120] sm:$0xff]
    %v400 = vld [vmem:[#allocation8 + $0x128] sm:$0xff]
    %v401 = vld [vmem:[#allocation8 + $0x130] sm:$0xff]
    %v402 = vld [vmem:[#allocation8 + $0x138] sm:$0xff]
    %v403 = vld [vmem:[#allocation8 + $0x140] sm:$0xff]
    %v404 = vld [vmem:[#allocation8 + $0x148] sm:$0xff]
    %v405 = vld [vmem:[#allocation8 + $0x150] sm:$0xff]
    %v406 = vld [vmem:[#allocation8 + $0x158] sm:$0xff]
    %v407 = vld [vmem:[#allocation8 + $0x160] sm:$0xff]
    %v408 = vld [vmem:[#allocation8 + $0x168] sm:$0xff]
    %v409 = vld [vmem:[#allocation8 + $0x170] sm:$0xff]
    %v410 = vld [vmem:[#allocation8 + $0x178] sm:$0xff]
    %v411 = vld [vmem:[#allocation8 + $0x180] sm:$0xff]
    %v412 = vld [vmem:[#allocation8 + $0x188] sm:$0xff]
    %v413 = vld [vmem:[#allocation8 + $0x190] sm:$0xff]
    %v414 = vld [vmem:[#allocation8 + $0x198] sm:$0xff]
    %v415 = vld [vmem:[#allocation8 + $0x1a0] sm:$0xff]
    %v416 = vld [vmem:[#allocation8 + $0x1a8] sm:$0xff]
    %v417 = vld [vmem:[#allocation8 + $0x1b0] sm:$0xff]
    %v418 = vld [vmem:[#allocation8 + $0x1b8] sm:$0xff]
    %v419 = vld [vmem:[#allocation8 + $0x1c0] sm:$0xff]
    %v420 = vld [vmem:[#allocation8 + $0x1c8] sm:$0xff]
    %v421 = vld [vmem:[#allocation8 + $0x1d0] sm:$0xff]
    %v422 = vld [vmem:[#allocation8 + $0x1d8] sm:$0xff]
    %v423 = vld [vmem:[#allocation8 + $0x1e0] sm:$0xff]
    %v424 = vld [vmem:[#allocation8 + $0x1e8] sm:$0xff]
    %v425 = vld [vmem:[#allocation8 + $0x1f0] sm:$0xff]
    %v426 = vld [vmem:[#allocation8 + $0x1f8] sm:$0xff]
    %427 = vmatprep.subr.mxu0 %v394
    %428 = vmatpush1.msra.mxu0 %v393
    %429 = vmatprep.subr.mxu0 %v392
    %430 = vmatpush1.msra.mxu0 %v391
    %431 = vmatprep.subr.mxu0 %v390
    %432 = vmatpush1.msra.mxu0 %v389
    %433 = vmatprep.subr.mxu0 %v388
    %434 = vmatpush1.msra.mxu0 %v387
    %435 = vmatprep.subr.mxu0 %v386
    %436 = vmatpush1.msra.mxu0 %v385
    %437 = vmatprep.subr.mxu0 %v384
    %438 = vmatpush1.msra.mxu0 %v383
    %439 = vmatprep.subr.mxu0 %v382
    %440 = vmatpush1.msra.mxu0 %v381
    %441 = vmatprep.subr.mxu0 %v380
    %442 = vmatpush1.msra.mxu0 %v379
    %443 = vmatprep.subr.mxu0 %v378
    %444 = vmatpush1.msra.mxu0 %v377
    %445 = vmatprep.subr.mxu0 %v376
    %446 = vmatpush1.msra.mxu0 %v375
    %447 = vmatprep.subr.mxu0 %v374
    %448 = vmatpush1.msra.mxu0 %v373
    %449 = vmatprep.subr.mxu0 %v372
    %450 = vmatpush1.msra.mxu0 %v371
    %451 = vmatprep.subr.mxu0 %v370
    %452 = vmatpush1.msra.mxu0 %v369
    %453 = vmatprep.subr.mxu0 %v368
    %454 = vmatpush1.msra.mxu0 %v367
    %455 = vmatprep.subr.mxu0 %v366
    %456 = vmatpush1.msra.mxu0 %v365
    %457 = vmatprep.subr.mxu0 %v364
    %458 = vmatpush1.msra.mxu0 %v363
    %459 = vmatprep.subr.mxu0 %v426
    %460 = vmatpush2.msra.mxu0 %v425
    %461 = vmatprep.subr.mxu0 %v424
    %462 = vmatpush2.msra.mxu0 %v423
    %463 = vmatprep.subr.mxu0 %v422
    %464 = vmatpush2.msra.mxu0 %v421
    %465 = vmatprep.subr.mxu0 %v420
    %466 = vmatpush2.msra.mxu0 %v419
    %467 = vmatprep.subr.mxu0 %v418
    %468 = vmatpush2.msra.mxu0 %v417
    %469 = vmatprep.subr.mxu0 %v416
    %470 = vmatpush2.msra.mxu0 %v415
    %471 = vmatprep.subr.mxu0 %v414
    %472 = vmatpush2.msra.mxu0 %v413
    %473 = vmatprep.subr.mxu0 %v412
    %474 = vmatpush2.msra.mxu0 %v411
    %475 = vmatprep.subr.mxu0 %v410
    %476 = vmatpush2.msra.mxu0 %v409
    %477 = vmatprep.subr.mxu0 %v408
    %478 = vmatpush2.msra.mxu0 %v407
    %479 = vmatprep.subr.mxu0 %v406
    %480 = vmatpush2.msra.mxu0 %v405
    %481 = vmatprep.subr.mxu0 %v404
    %482 = vmatpush2.msra.mxu0 %v403
    %483 = vmatprep.subr.mxu0 %v402
    %484 = vmatpush2.msra.mxu0 %v401
    %485 = vmatprep.subr.mxu0 %v400
    %486 = vmatpush2.msra.mxu0 %v399
    %487 = vmatprep.subr.mxu0 %v398
    %488 = vmatpush2.msra.mxu0 %v397
    %489 = vmatprep.subr.mxu0 %v396
    %490 = vmatpush2.msra.mxu0 %v395
    %491 = vmatprep.mubr.f32.mxu0 %v332
    %492 = vmatmul.mubr.f32.gmra.mxu0 %v331
    %v493 = vpop.f32.mrf.mxu0
    %v494 = vadd.f32 0.0, %v493
    %v495 = vpop.f32.mrf.mxu0
    %v496 = vadd.f32 0.0, %v495
    %497 = vmatprep.mubr.f32.mxu0 %v334
    %498 = vmatmul.mubr.f32.gmra.mxu0 %v333
    %v499 = vpop.f32.mrf.mxu0
    %v500 = vadd.f32 0.0, %v499
    %v501 = vpop.f32.mrf.mxu0
    %v502 = vadd.f32 0.0, %v501
    %503 = vmatprep.mubr.f32.mxu0 %v336
    %504 = vmatmul.mubr.f32.gmra.mxu0 %v335
    %v505 = vpop.f32.mrf.mxu0
    %v506 = vadd.f32 0.0, %v505
    %v507 = vpop.f32.mrf.mxu0
    %v508 = vadd.f32 0.0, %v507
    %509 = vmatprep.mubr.f32.mxu0 %v338
    %510 = vmatmul.mubr.f32.gmra.mxu0 %v337
    %v511 = vpop.f32.mrf.mxu0
    %v512 = vadd.f32 0.0, %v511
    %v513 = vpop.f32.mrf.mxu0
    %v514 = vadd.f32 0.0, %v513
    %515 = vmatprep.mubr.f32.mxu0 %v340
    %516 = vmatmul.mubr.f32.gmra.mxu0 %v339
    %v517 = vpop.f32.mrf.mxu0
    %v518 = vadd.f32 0.0, %v517
    %v519 = vpop.f32.mrf.mxu0
    %v520 = vadd.f32 0.0, %v519
    %521 = vmatprep.mubr.f32.mxu0 %v342
    %522 = vmatmul.mubr.f32.gmra.mxu0 %v341
    %v523 = vpop.f32.mrf.mxu0
    %v524 = vadd.f32 0.0, %v523
    %v525 = vpop.f32.mrf.mxu0
    %v526 = vadd.f32 0.0, %v525
    %527 = vmatprep.mubr.f32.mxu0 %v344
    %528 = vmatmul.mubr.f32.gmra.mxu0 %v343
    %v529 = vpop.f32.mrf.mxu0
    %v530 = vadd.f32 0.0, %v529
    %v531 = vpop.f32.mrf.mxu0
    %v532 = vadd.f32 0.0, %v531
    %533 = vmatprep.mubr.f32.mxu0 %v346
    %534 = vmatmul.mubr.f32.gmra.mxu0 %v345
    %v535 = vpop.f32.mrf.mxu0
    %v536 = vadd.f32 0.0, %v535
    %v537 = vpop.f32.mrf.mxu0
    %v538 = vadd.f32 0.0, %v537
    %539 = vmatprep.mubr.f32.mxu0 %v348
    %540 = vmatmul.mubr.f32.gmra.mxu0 %v347
    %v541 = vpop.f32.mrf.mxu0
    %v542 = vadd.f32 0.0, %v541
    %v543 = vpop.f32.mrf.mxu0
    %v544 = vadd.f32 0.0, %v543
    %545 = vmatprep.mubr.f32.mxu0 %v350
    %546 = vmatmul.mubr.f32.gmra.mxu0 %v349
    %v547 = vpop.f32.mrf.mxu0
    %v548 = vadd.f32 0.0, %v547
    %v549 = vpop.f32.mrf.mxu0
    %v550 = vadd.f32 0.0, %v549
    %551 = vmatprep.mubr.f32.mxu0 %v352
    %552 = vmatmul.mubr.f32.gmra.mxu0 %v351
    %v553 = vpop.f32.mrf.mxu0
    %v554 = vadd.f32 0.0, %v553
    %v555 = vpop.f32.mrf.mxu0
    %v556 = vadd.f32 0.0, %v555
    %557 = vmatprep.mubr.f32.mxu0 %v354
    %558 = vmatmul.mubr.f32.gmra.mxu0 %v353
    %v559 = vpop.f32.mrf.mxu0
    %v560 = vadd.f32 0.0, %v559
    %v561 = vpop.f32.mrf.mxu0
    %v562 = vadd.f32 0.0, %v561
    %563 = vmatprep.mubr.f32.mxu0 %v356
    %564 = vmatmul.mubr.f32.gmra.mxu0 %v355
    %v565 = vpop.f32.mrf.mxu0
    %v566 = vadd.f32 0.0, %v565
    %v567 = vpop.f32.mrf.mxu0
    %v568 = vadd.f32 0.0, %v567
    %569 = vmatprep.mubr.f32.mxu0 %v358
    %570 = vmatmul.mubr.f32.gmra.mxu0 %v357
    %v571 = vpop.f32.mrf.mxu0
    %v572 = vadd.f32 0.0, %v571
    %v573 = vpop.f32.mrf.mxu0
    %v574 = vadd.f32 0.0, %v573
    %575 = vmatprep.mubr.f32.mxu0 %v360
    %576 = vmatmul.mubr.f32.gmra.mxu0 %v359
    %v577 = vpop.f32.mrf.mxu0
    %v578 = vadd.f32 0.0, %v577
    %v579 = vpop.f32.mrf.mxu0
    %v580 = vadd.f32 0.0, %v579
    %581 = vmatprep.mubr.f32.mxu0 %v362
    %582 = vmatmul.mubr.f32.gmra.mxu0 %v361
    %v583 = vpop.f32.mrf.mxu0
    %v584 = vadd.f32 0.0, %v583
    %v585 = vpop.f32.mrf.mxu0
    %v586 = vadd.f32 0.0, %v585
    %587 = vdwg.mxu0
    %v588 = vadd.f32 %v299, %v494
    %v589 = vadd.f32 %v300, %v496
    %v590 = vadd.f32 %v301, %v500
    %v591 = vadd.f32 %v302, %v502
    %v592 = vadd.f32 %v303, %v506
    %v593 = vadd.f32 %v304, %v508
    %v594 = vadd.f32 %v305, %v512
    %v595 = vadd.f32 %v306, %v514
    %v596 = vadd.f32 %v307, %v518
    %v597 = vadd.f32 %v308, %v520
    %v598 = vadd.f32 %v309, %v524
    %v599 = vadd.f32 %v310, %v526
    %v600 = vadd.f32 %v311, %v530
    %v601 = vadd.f32 %v312, %v532
    %v602 = vadd.f32 %v313, %v536
    %v603 = vadd.f32 %v314, %v538
    %v604 = vadd.f32 %v315, %v542
    %v605 = vadd.f32 %v316, %v544
    %v606 = vadd.f32 %v317, %v548
    %v607 = vadd.f32 %v318, %v550
    %v608 = vadd.f32 %v319, %v554
    %v609 = vadd.f32 %v320, %v556
    %v610 = vadd.f32 %v321, %v560
    %v611 = vadd.f32 %v322, %v562
    %v612 = vadd.f32 %v323, %v566
    %v613 = vadd.f32 %v324, %v568
    %v614 = vadd.f32 %v325, %v572
    %v615 = vadd.f32 %v326, %v574
    %v616 = vadd.f32 %v327, %v578
    %v617 = vadd.f32 %v328, %v580
    %v618 = vadd.f32 %v329, %v584
    %v619 = vadd.f32 %v330, %v586
    %620 = vst [vmem:[#allocation10] sm:$0xff] %v588
    %621 = vst [vmem:[#allocation10 + $0x8] sm:$0xff] %v589
    %622 = vst [vmem:[#allocation10 + $0x10] sm:$0xff] %v590
    %623 = vst [vmem:[#allocation10 + $0x18] sm:$0xff] %v591
    %624 = vst [vmem:[#allocation10 + $0x20] sm:$0xff] %v592
    %625 = vst [vmem:[#allocation10 + $0x28] sm:$0xff] %v593
    %626 = vst [vmem:[#allocation10 + $0x30] sm:$0xff] %v594
    %627 = vst [vmem:[#allocation10 + $0x38] sm:$0xff] %v595
    %628 = vst [vmem:[#allocation10 + $0x40] sm:$0xff] %v596
    %629 = vst [vmem:[#allocation10 + $0x48] sm:$0xff] %v597
    %630 = vst [vmem:[#allocation10 + $0x50] sm:$0xff] %v598
    %631 = vst [vmem:[#allocation10 + $0x58] sm:$0xff] %v599
    %632 = vst [vmem:[#allocation10 + $0x60] sm:$0xff] %v600
    %633 = vst [vmem:[#allocation10 + $0x68] sm:$0xff] %v601
    %634 = vst [vmem:[#allocation10 + $0x70] sm:$0xff] %v602
    %635 = vst [vmem:[#allocation10 + $0x78] sm:$0xff] %v603
    %636 = vst [vmem:[#allocation10 + $0x80] sm:$0xff] %v604
    %637 = vst [vmem:[#allocation10 + $0x88] sm:$0xff] %v605
    %638 = vst [vmem:[#allocation10 + $0x90] sm:$0xff] %v606
    %639 = vst [vmem:[#allocation10 + $0x98] sm:$0xff] %v607
    %640 = vst [vmem:[#allocation10 + $0xa0] sm:$0xff] %v608
    %641 = vst [vmem:[#allocation10 + $0xa8] sm:$0xff] %v609
    %642 = vst [vmem:[#allocation10 + $0xb0] sm:$0xff] %v610
    %643 = vst [vmem:[#allocation10 + $0xb8] sm:$0xff] %v611
    %644 = vst [vmem:[#allocation10 + $0xc0] sm:$0xff] %v612
    %645 = vst [vmem:[#allocation10 + $0xc8] sm:$0xff] %v613
    %646 = vst [vmem:[#allocation10 + $0xd0] sm:$0xff] %v614
    %647 = vst [vmem:[#allocation10 + $0xd8] sm:$0xff] %v615
    %648 = vst [vmem:[#allocation10 + $0xe0] sm:$0xff] %v616
    %649 = vst [vmem:[#allocation10 + $0xe8] sm:$0xff] %v617
    %650 = vst [vmem:[#allocation10 + $0xf0] sm:$0xff] %v618
    %651 = vst [vmem:[#allocation10 + $0xf8] sm:$0xff] %v619
    // Predicated region
    $region38: #{tpu_custom_call.1} parent=1 // pred_check
      _
    $region39: #{tpu_custom_call.1} parent=1 // pred_check_branch
      %653 = sbr.rel (0) target = $region41
    $region40: #{tpu_custom_call.1} parent=1 // pred_region
      %s655 = ssub.s32 4096, 4096
      %656 = vsyncadd [#allocation4], %s655
      %s657 = sshll.u32 [#allocation10], 4
      %s658 = int_to_ptr.vmem [resolvable:$true] %s657
      %663 = dma.vmem_to_hbm [thread:$0]  %s658, 4096, %s5, [#allocation4], 256, 256, 16
    $region41: #{tpu_custom_call.1} parent=1 // pred_fallthru
      _
    // Predicated region
    $region42: #{tpu_custom_call.1} parent=1 // pred_check
      _
    $region43: #{tpu_custom_call.1} parent=1 // pred_check_branch
      %665 = sbr.rel (0) target = $region45
    $region44: #{tpu_custom_call.1} parent=1 // pred_region
      %666 = dma.done [#allocation4], 4096
    $region45: #{tpu_custom_call.1} parent=1 // pred_fallthru
      _
    %667 = vsyncpa [#allocation3], 1
    %668 = vsyncpa [#allocation6], 1
    %669 = vsyncpa [#allocation9], 1
    %670 = vsyncpa [#allocation4], 1

</llo_original>
